<compile_context>
chip_gen: v7x
topology: tpu7x:2x2x1
jax: 0.10.0
libtpu: 0.0.40
codegen_flags: <defaults>
</compile_context>

<pallas_src>
import functools
import math

import jax
import jax.numpy as jnp
from jax.experimental import pallas as pl
from jax.experimental.pallas import tpu as pltpu


def _pick_tb(batch, arg, hw):
    """Batches per grid step.

    Caps: (a) one bf16 (TB*arg, HW) stream block <= ~2 MiB, so x0 + x1 + out
    double-buffered plus the in-kernel f32 temporaries fit comfortably inside
    every generation's scoped VMEM (incl. v7x's 64 MiB); (b) rows = TB*arg <=
    128, which keeps the block-diagonal 1x1-conv matmul a tiny fraction of the
    HBM time even on v5e's slower MXU.
    """
    per_batch_bytes = arg * hw * 2
    tb = min(batch,
             max(1, (2 << 20) // per_batch_bytes),
             max(1, 128 // arg))
    tb = max(1, tb)
    if tb < batch:
        # Keep the block row count a multiple of 8 when the row axis is tiled.
        step = 8 // math.gcd(arg, 8)
        if tb >= step:
            tb = (tb // step) * step
    return tb


def _shuffle_kernel(a00_ref, a01_ref, a10_ref, m0_ref, m1_ref, bias_ref,
                    x0_ref, x1_ref, o_ref, *, rows, inv_hw, total_rows, has_tail):
    # a00/a01/a10 : (rows, rows) f32  -- ECA 3-tap band matrices (A11 == A00)
    # m0/m1       : (rows, rows) bf16 -- kron(I_TB, W_half), block-diagonal 1x1 conv
    # bias        : (rows, 1)    f32
    # x0/x1/out   : (rows, HW)   bf16 -- batch*channel on sublanes, space on lanes
    x0 = x0_ref[...]
    x1 = x1_ref[...]

    # --- ECA squeeze: per-(batch, channel) spatial mean, f32 accumulation.
    p0 = jnp.sum(x0.astype(jnp.float32), axis=-1, keepdims=True) * inv_hw   # (rows, 1)
    p1 = jnp.sum(x1.astype(jnp.float32), axis=-1, keepdims=True) * inv_hw

    # --- ECA excite: 3-tap Conv1d(pad=1, no bias) over each batch's channel
    #     vector [x0 ch 0..arg-1 | x1 ch arg..2*arg-1] as tiny band-matrix
    #     products, then one sigmoid per half for the whole block.
    y0 = jnp.dot(a00_ref[...], p0) + jnp.dot(a01_ref[...], p1)
    y1 = jnp.dot(a10_ref[...], p0) + jnp.dot(a00_ref[...], p1)
    s0 = jax.nn.sigmoid(y0).astype(x0.dtype)          # (rows, 1) bf16 gate
    s1 = jax.nn.sigmoid(y1).astype(x1.dtype)

    # --- Gate: a single bf16 row-scale per input half (no f32 full-tile copies).
    g0 = x0 * s0
    g1 = x1 * s1
    if has_tail:
        # The last grid step may read rows past B*arg; zero them so the matmul
        # below cannot leak garbage/NaN into valid output rows.
        row = jax.lax.broadcasted_iota(jnp.int32, (rows, 1), 0)
        valid = pl.program_id(0) * rows + row < total_rows
        g0 = jnp.where(valid, g0, jnp.zeros_like(g0))
        g1 = jnp.where(valid, g1, jnp.zeros_like(g1))

    # --- 1x1 Conv2d (2*arg -> arg): one MXU matmul per input half against the
    #     block-diagonal kron(I_TB, W) weights; f32 accumulate, bf16 store.
    acc = jnp.dot(m0_ref[...], g0, preferred_element_type=jnp.float32)
    acc = acc + jnp.dot(m1_ref[...], g1, preferred_element_type=jnp.float32)
    o_ref[...] = (acc + bias_ref[...]).astype(o_ref.dtype)


def shuffle_forward(x0, x1, conv1d_w, conv2d_w, conv2d_b):
    """x0, x1: (B, arg, H, W) bf16.  Returns (B, arg, H, W) bf16."""
    B, ARG, H, W = x0.shape
    assert x1.shape == x0.shape
    C = 2 * ARG
    HW = H * W
    total_rows = B * ARG

    # Dense 2D presentation: batch*channel rows, full spatial extent on lanes.
    x0f = x0.reshape(total_rows, HW)
    x1f = x1.reshape(total_rows, HW)

    TB = _pick_tb(B, ARG, HW)
    R = TB * ARG
    n_blk = pl.cdiv(B, TB)
    has_tail = (B % TB) != 0
    # TODO(synk): very large H*W (one batch > ~2 MiB/stream) still ships the full
    # spatial extent per step; a two-pass (pool, then gate+1x1) kernel would
    # allow spatial tiling if that regime ever matters.

    # ---- Host-side constant prep (would live in module init in a real model).
    taps = conv1d_w.reshape(3).astype(jnp.float32)
    k0, k1, k2 = taps[0], taps[1], taps[2]
    ri = jnp.arange(R, dtype=jnp.int32)[:, None]
    ci = jnp.arange(R, dtype=jnp.int32)[None, :]
    ai = ri % ARG
    zero = jnp.float32(0.0)
    # A00 (also A11): in-half neighbours; A01 / A10: the single cross-half tap.
    a00 = (jnp.where((ci == ri - 1) & (ai > 0), k0, zero)
           + jnp.where(ci == ri, k1, zero)
           + jnp.where((ci == ri + 1) & (ai < ARG - 1), k2, zero))
    a01 = jnp.where((ai == ARG - 1) & (ci == ri - (ARG - 1)), k2, zero)
    a10 = jnp.where((ai == 0) & (ci == ri + (ARG - 1)), k0, zero)

    w2 = conv2d_w.reshape(ARG, C).astype(jnp.bfloat16)
    eye = jnp.eye(TB, dtype=jnp.bfloat16)
    m0 = jnp.kron(eye, w2[:, :ARG])                       # (R, R) block-diagonal
    m1 = jnp.kron(eye, w2[:, ARG:])
    bias_col = jnp.tile(conv2d_b.astype(jnp.float32).reshape(ARG), TB).reshape(R, 1)

    kernel = functools.partial(
        _shuffle_kernel, rows=R, inv_hw=1.0 / float(HW),
        total_rows=total_rows, has_tail=has_tail)

    out = pl.pallas_call(
        kernel,
        out_shape=jax.ShapeDtypeStruct((total_rows, HW), jnp.bfloat16),
        grid_spec=pltpu.PrefetchScalarGridSpec(
            num_scalar_prefetch=0,
            grid=(n_blk,),
            in_specs=[
                pl.BlockSpec((R, R), lambda i: (0, 0)),    # a00 (ECA band)
                pl.BlockSpec((R, R), lambda i: (0, 0)),    # a01
                pl.BlockSpec((R, R), lambda i: (0, 0)),    # a10
                pl.BlockSpec((R, R), lambda i: (0, 0)),    # kron(I, W[:, :arg])
                pl.BlockSpec((R, R), lambda i: (0, 0)),    # kron(I, W[:, arg:])
                pl.BlockSpec((R, 1), lambda i: (0, 0)),    # bias column
                pl.BlockSpec((R, HW), lambda i: (i, 0)),   # x0 rows
                pl.BlockSpec((R, HW), lambda i: (i, 0)),   # x1 rows
            ],
            out_specs=pl.BlockSpec((R, HW), lambda i: (i, 0)),
        ),
        compiler_params=pltpu.CompilerParams(
            dimension_semantics=("parallel",),   # batch blocks are independent (v7x TCs)
            vmem_limit_bytes=40 << 20,           # headroom on v5e's 16 MiB scoped default
        ),
    )(a00, a01, a10, m0, m1, bias_col, x0f, x1f)

    return out.reshape(B, ARG, H, W)


if __name__ == "__main__":
    ARG = 4                 # self.arg  -> channels = 2*arg = 8
    B, H, W = 2, 16, 16
    C = 2 * ARG

    key = jax.random.PRNGKey(0)
    kx0, kx1, kk, kw2, kb = jax.random.split(key, 5)

    x0 = jax.random.normal(kx0, (B, ARG, H, W), jnp.float32).astype(jnp.bfloat16)
    x1 = jax.random.normal(kx1, (B, ARG, H, W), jnp.float32).astype(jnp.bfloat16)

    # nn.Conv1d(1, 1, 3, padding=1, bias=False).half() -> weight (1, 1, 3)
    conv1d_w = (jax.random.normal(kk, (1, 1, 3), jnp.float32)
                * (1.0 / jnp.sqrt(3.0))).astype(jnp.bfloat16)
    # nn.Conv2d(2*arg, arg, kernel_size=1).half() -> weight (arg, 2*arg, 1, 1), bias (arg,)
    conv2d_w = (jax.random.normal(kw2, (ARG, C, 1, 1), jnp.float32)
                * (1.0 / jnp.sqrt(C))).astype(jnp.bfloat16)
    conv2d_b = (jax.random.normal(kb, (ARG,), jnp.float32) * 0.1).astype(jnp.bfloat16)

    out = shuffle_forward(x0, x1, conv1d_w, conv2d_w, conv2d_b)
    out = jax.block_until_ready(out)

    # Pure-JAX reference mirroring the kernel's dtype pipeline.
    xcat = jnp.concatenate([x0, x1], axis=1)                          # (B, C, H, W) bf16
    pooled = jnp.mean(xcat.astype(jnp.float32), axis=(2, 3))          # (B, C) f32
    kf = conv1d_w.reshape(3).astype(jnp.float32)
    pz = jnp.pad(pooled, ((0, 0), (1, 1)))
    y = kf[0] * pz[:, 0:C] + kf[1] * pz[:, 1:C + 1] + kf[2] * pz[:, 2:C + 2]
    scale = jax.nn.sigmoid(y).astype(jnp.bfloat16)                    # (B, C) bf16
    xs = (xcat * scale[:, :, None, None]).astype(jnp.float32)
    w2f = conv2d_w.reshape(ARG, C).astype(jnp.float32)
    ref = (jnp.einsum("oc,bchw->bohw", w2f, xs)
           + conv2d_b.astype(jnp.float32)[None, :, None, None]).astype(jnp.bfloat16)

    assert out.shape == (B, ARG, H, W)
    assert out.dtype == jnp.bfloat16
    assert jnp.allclose(out.astype(jnp.float32), ref.astype(jnp.float32),
                        atol=5e-2, rtol=5e-2)
    print("KERNEL_OK")
</pallas_src>

<mosaic_0001>
module attributes {stable_mosaic.version = 11 : i64} {
  func.func @_shuffle_kernel(%arg0: i32, %arg1: memref<8x8xf32, #tpu.memory_space<vmem>>, %arg2: memref<8x8xf32, #tpu.memory_space<vmem>>, %arg3: memref<8x8xf32, #tpu.memory_space<vmem>>, %arg4: memref<8x8xbf16, #tpu.memory_space<vmem>>, %arg5: memref<8x8xbf16, #tpu.memory_space<vmem>>, %arg6: memref<8x1xf32, #tpu.memory_space<vmem>>, %arg7: memref<8x256xbf16, #tpu.memory_space<vmem>>, %arg8: memref<8x256xbf16, #tpu.memory_space<vmem>>, %arg9: memref<8x256xbf16, #tpu.memory_space<vmem>>) attributes {dimension_semantics = [#tpu.dimension_semantics<parallel>], iteration_bounds = array<i64: 1>, scalar_prefetch = 0 : i64, scratch_operands = 0 : i64, tpu.core_type = #tpu.core_type<tc>, window_params = [{pipeline_mode = #tpu.pipeline_mode<synchronous>, transform_indices = @transform_0, window_bounds = array<i64: 8, 8>}, {pipeline_mode = #tpu.pipeline_mode<synchronous>, transform_indices = @transform_1, window_bounds = array<i64: 8, 8>}, {pipeline_mode = #tpu.pipeline_mode<synchronous>, transform_indices = @transform_2, window_bounds = array<i64: 8, 8>}, {pipeline_mode = #tpu.pipeline_mode<synchronous>, transform_indices = @transform_3, window_bounds = array<i64: 8, 8>}, {pipeline_mode = #tpu.pipeline_mode<synchronous>, transform_indices = @transform_4, window_bounds = array<i64: 8, 8>}, {pipeline_mode = #tpu.pipeline_mode<synchronous>, transform_indices = @transform_5, window_bounds = array<i64: 8, 1>}, {transform_indices = @transform_6, window_bounds = array<i64: 8, 256>}, {transform_indices = @transform_7, window_bounds = array<i64: 8, 256>}, {transform_indices = @transform_8, window_bounds = array<i64: 8, 256>}]} {
    %c0 = arith.constant 0 : index
    %c0_0 = arith.constant 0 : index
    %0 = vector.load %arg7[%c0, %c0_0] : memref<8x256xbf16, #tpu.memory_space<vmem>>, vector<8x256xbf16>
    %c0_1 = arith.constant 0 : index
    %c0_2 = arith.constant 0 : index
    %1 = vector.load %arg8[%c0_1, %c0_2] : memref<8x256xbf16, #tpu.memory_space<vmem>>, vector<8x256xbf16>
    %2 = arith.extf %0 : vector<8x256xbf16> to vector<8x256xf32>
    %cst = arith.constant dense<0.000000e+00> : vector<8xf32>
    %3 = vector.multi_reduction <add>, %2, %cst [1] : vector<8x256xf32> to vector<8xf32>
    %4 = vector.shape_cast %3 : vector<8xf32> to vector<8x1xf32>
    %cst_3 = arith.constant 3.906250e-03 : f32
    %5 = vector.broadcast %cst_3 : f32 to vector<8x1xf32>
    %6 = arith.mulf %4, %5 : vector<8x1xf32>
    %7 = arith.extf %1 : vector<8x256xbf16> to vector<8x256xf32>
    %cst_4 = arith.constant dense<0.000000e+00> : vector<8xf32>
    %8 = vector.multi_reduction <add>, %7, %cst_4 [1] : vector<8x256xf32> to vector<8xf32>
    %9 = vector.shape_cast %8 : vector<8xf32> to vector<8x1xf32>
    %cst_5 = arith.constant 3.906250e-03 : f32
    %10 = vector.broadcast %cst_5 : f32 to vector<8x1xf32>
    %11 = arith.mulf %9, %10 : vector<8x1xf32>
    %c0_6 = arith.constant 0 : index
    %c0_7 = arith.constant 0 : index
    %12 = vector.load %arg1[%c0_6, %c0_7] : memref<8x8xf32, #tpu.memory_space<vmem>>, vector<8x8xf32>
    %cst_8 = arith.constant dense<0.000000e+00> : vector<8x1xf32>
    %13 = tpu.matmul %12, %6, %cst_8 {dimension_numbers = #tpu.dot_dimension_numbers<[1], [0], [0], [1], [0, 0, 1, 1], [], []>} : vector<8x8xf32>, vector<8x1xf32>, vector<8x1xf32> -> vector<8x1xf32>
    %c0_9 = arith.constant 0 : index
    %c0_10 = arith.constant 0 : index
    %14 = vector.load %arg2[%c0_9, %c0_10] : memref<8x8xf32, #tpu.memory_space<vmem>>, vector<8x8xf32>
    %cst_11 = arith.constant dense<0.000000e+00> : vector<8x1xf32>
    %15 = tpu.matmul %14, %11, %cst_11 {dimension_numbers = #tpu.dot_dimension_numbers<[1], [0], [0], [1], [0, 0, 1, 1], [], []>} : vector<8x8xf32>, vector<8x1xf32>, vector<8x1xf32> -> vector<8x1xf32>
    %16 = arith.addf %13, %15 : vector<8x1xf32>
    %c0_12 = arith.constant 0 : index
    %c0_13 = arith.constant 0 : index
    %17 = vector.load %arg3[%c0_12, %c0_13] : memref<8x8xf32, #tpu.memory_space<vmem>>, vector<8x8xf32>
    %cst_14 = arith.constant dense<0.000000e+00> : vector<8x1xf32>
    %18 = tpu.matmul %17, %6, %cst_14 {dimension_numbers = #tpu.dot_dimension_numbers<[1], [0], [0], [1], [0, 0, 1, 1], [], []>} : vector<8x8xf32>, vector<8x1xf32>, vector<8x1xf32> -> vector<8x1xf32>
    %c0_15 = arith.constant 0 : index
    %c0_16 = arith.constant 0 : index
    %19 = vector.load %arg1[%c0_15, %c0_16] : memref<8x8xf32, #tpu.memory_space<vmem>>, vector<8x8xf32>
    %cst_17 = arith.constant dense<0.000000e+00> : vector<8x1xf32>
    %20 = tpu.matmul %19, %11, %cst_17 {dimension_numbers = #tpu.dot_dimension_numbers<[1], [0], [0], [1], [0, 0, 1, 1], [], []>} : vector<8x8xf32>, vector<8x1xf32>, vector<8x1xf32> -> vector<8x1xf32>
    %21 = arith.addf %18, %20 : vector<8x1xf32>
    %22 = arith.negf %16 : vector<8x1xf32>
    %23 = math.exp %22 : vector<8x1xf32>
    %cst_18 = arith.constant 1.000000e+00 : f32
    %24 = vector.broadcast %cst_18 : f32 to vector<8x1xf32>
    %25 = arith.addf %24, %23 : vector<8x1xf32>
    %26 = arith.divf %24, %25 : vector<8x1xf32>
    %27 = arith.truncf %26 : vector<8x1xf32> to vector<8x1xbf16>
    %28 = arith.negf %21 : vector<8x1xf32>
    %29 = math.exp %28 : vector<8x1xf32>
    %cst_19 = arith.constant 1.000000e+00 : f32
    %30 = vector.broadcast %cst_19 : f32 to vector<8x1xf32>
    %31 = arith.addf %30, %29 : vector<8x1xf32>
    %32 = arith.divf %30, %31 : vector<8x1xf32>
    %33 = arith.truncf %32 : vector<8x1xf32> to vector<8x1xbf16>
    %34 = vector.broadcast %27 : vector<8x1xbf16> to vector<8x256xbf16>
    %35 = arith.mulf %0, %34 : vector<8x256xbf16>
    %36 = vector.broadcast %33 : vector<8x1xbf16> to vector<8x256xbf16>
    %37 = arith.mulf %1, %36 : vector<8x256xbf16>
    %c0_20 = arith.constant 0 : index
    %c0_21 = arith.constant 0 : index
    %38 = vector.load %arg4[%c0_20, %c0_21] : memref<8x8xbf16, #tpu.memory_space<vmem>>, vector<8x8xbf16>
    %cst_22 = arith.constant dense<0.000000e+00> : vector<8x256xf32>
    %39 = tpu.matmul %38, %35, %cst_22 {dimension_numbers = #tpu.dot_dimension_numbers<[1], [0], [0], [1], [0, 0, 1, 1], [], []>} : vector<8x8xbf16>, vector<8x256xbf16>, vector<8x256xf32> -> vector<8x256xf32>
    %c0_23 = arith.constant 0 : index
    %c0_24 = arith.constant 0 : index
    %40 = vector.load %arg5[%c0_23, %c0_24] : memref<8x8xbf16, #tpu.memory_space<vmem>>, vector<8x8xbf16>
    %cst_25 = arith.constant dense<0.000000e+00> : vector<8x256xf32>
    %41 = tpu.matmul %40, %37, %cst_25 {dimension_numbers = #tpu.dot_dimension_numbers<[1], [0], [0], [1], [0, 0, 1, 1], [], []>} : vector<8x8xbf16>, vector<8x256xbf16>, vector<8x256xf32> -> vector<8x256xf32>
    %42 = arith.addf %39, %41 : vector<8x256xf32>
    %c0_26 = arith.constant 0 : index
    %c0_27 = arith.constant 0 : index
    %43 = vector.load %arg6[%c0_26, %c0_27] : memref<8x1xf32, #tpu.memory_space<vmem>>, vector<8x1xf32>
    %44 = vector.broadcast %43 : vector<8x1xf32> to vector<8x256xf32>
    %45 = arith.addf %42, %44 : vector<8x256xf32>
    %46 = arith.truncf %45 : vector<8x256xf32> to vector<8x256xbf16>
    %c0_28 = arith.constant 0 : index
    %c0_29 = arith.constant 0 : index
    %47 = vector.load %arg9[%c0_28, %c0_29] : memref<8x256xbf16, #tpu.memory_space<vmem>>, vector<8x256xbf16>
    tpu.vector_store %arg9[%c0_28, %c0_29], %46 {strides = array<i32>} : memref<8x256xbf16, #tpu.memory_space<vmem>>, vector<8x256xbf16>,
    return
  }
  func.func @transform_0(%arg0: i32) -> (i32, i32) {
    %c0_i32 = arith.constant 0 : i32
    %c0_i32_0 = arith.constant 0 : i32
    %c0_i32_1 = arith.constant 0 : i32
    return %c0_i32, %c0_i32_0 : i32, i32
  }
  func.func @transform_1(%arg0: i32) -> (i32, i32) {
    %c0_i32 = arith.constant 0 : i32
    %c0_i32_0 = arith.constant 0 : i32
    %c0_i32_1 = arith.constant 0 : i32
    return %c0_i32, %c0_i32_0 : i32, i32
  }
  func.func @transform_2(%arg0: i32) -> (i32, i32) {
    %c0_i32 = arith.constant 0 : i32
    %c0_i32_0 = arith.constant 0 : i32
    %c0_i32_1 = arith.constant 0 : i32
    return %c0_i32, %c0_i32_0 : i32, i32
  }
  func.func @transform_3(%arg0: i32) -> (i32, i32) {
    %c0_i32 = arith.constant 0 : i32
    %c0_i32_0 = arith.constant 0 : i32
    %c0_i32_1 = arith.constant 0 : i32
    return %c0_i32, %c0_i32_0 : i32, i32
  }
  func.func @transform_4(%arg0: i32) -> (i32, i32) {
    %c0_i32 = arith.constant 0 : i32
    %c0_i32_0 = arith.constant 0 : i32
    %c0_i32_1 = arith.constant 0 : i32
    return %c0_i32, %c0_i32_0 : i32, i32
  }
  func.func @transform_5(%arg0: i32) -> (i32, i32) {
    %c0_i32 = arith.constant 0 : i32
    %c0_i32_0 = arith.constant 0 : i32
    %c0_i32_1 = arith.constant 0 : i32
    return %c0_i32, %c0_i32_0 : i32, i32
  }
  func.func @transform_6(%arg0: i32) -> (i32, i32) {
    %c0_i32 = arith.constant 0 : i32
    %c0_i32_0 = arith.constant 0 : i32
    return %arg0, %c0_i32 : i32, i32
  }
  func.func @transform_7(%arg0: i32) -> (i32, i32) {
    %c0_i32 = arith.constant 0 : i32
    %c0_i32_0 = arith.constant 0 : i32
    return %arg0, %c0_i32 : i32, i32
  }
  func.func @transform_8(%arg0: i32) -> (i32, i32) {
    %c0_i32 = arith.constant 0 : i32
    %c0_i32_0 = arith.constant 0 : i32
    return %arg0, %c0_i32 : i32, i32
  }
}

</mosaic_0001>

<llo_original>
// kernel: tpu_custom_call.1
$region0: #{tpu_custom_call.1}
  #allocation0 [shape = 'u32[]', space=smem, size = 0x4, offset = 0x4, fixed_abs, tag = 'smem constant byte address 0x4 - core index']
  #allocation1 [shape = 'u32[144,128]{1,0:T(1,128)}', space=vmem, size = 0x12000, scoped, tag = 'internal scratch']
  %s0 = inlined_call_operand.vmem [shape: f32[8,8], index: 0, kind: input, shape index: {}]
  %s1 = inlined_call_operand.hbm [shape: f32[8,8], index: 1, kind: input, shape index: {}]
  %s2 = inlined_call_operand.vmem [shape: f32[8,8], index: 2, kind: input, shape index: {}]
  %s3 = inlined_call_operand.hbm [shape: bf16[8,8], index: 3, kind: input, shape index: {}]
  %s4 = inlined_call_operand.hbm [shape: bf16[8,8], index: 4, kind: input, shape index: {}]
  %s5 = inlined_call_operand.vmem [shape: f32[8,1], index: 5, kind: input, shape index: {}]
  %s6 = inlined_call_operand.vmem [shape: bf16[8,256], index: 6, kind: input, shape index: {}]
  %s7 = inlined_call_operand.vmem [shape: bf16[8,256], index: 7, kind: input, shape index: {}]
  %s8 = inlined_call_operand.hbm [shape: bf16[8,256], index: 8, kind: output, shape index: {}]
  %s9 = sld [smem:[#allocation0]]
  $region54: #{tpu_custom_call.1} parent=0
    _
  %s11 = ssub.s32 1, %s9
  %s12 = scalar_select 0, %s11, %s9
  $region1: #{tpu_custom_call.1} parent=0
    #allocation2 [shape = 'u8[4096]{0}', space=vmem, size = 0x1000, scoped, tag = 'input window, operand 1, single buffered']
    #allocation3 [shape = 's32[1]{0}', space=sflag, size = 0x4, scoped, tag = 'scoped memory for tpu_custom_call.1']
    #allocation4 [shape = 's32[1]{0}', space=sflag, size = 0x4, scoped, tag = 'scoped memory for tpu_custom_call.1']
    #allocation5 [shape = 'u8[2048]{0}', space=vmem, size = 0x800, scoped, tag = 'input window, operand 3, single buffered']
    #allocation6 [shape = 's32[1]{0}', space=sflag, size = 0x4, scoped, tag = 'scoped memory for tpu_custom_call.1']
    #allocation7 [shape = 'u8[2048]{0}', space=vmem, size = 0x800, scoped, tag = 'input window, operand 4, single buffered']
    #allocation8 [shape = 'u8[4096]{0}', space=vmem, size = 0x1000, scoped, tag = 'output window, operand 0, single buffered']
    %13 = vsyncpa [#allocation3], 0
    %14 = vsyncpa [#allocation6], 0
    %15 = vsyncpa [#allocation4], 0
    // Predicated region
    $region2: #{tpu_custom_call.1} parent=1 // pred_check
      _
    $region3: #{tpu_custom_call.1} parent=1 // pred_check_branch
      %17 = sbr.rel (0) target = $region5
    $region4: #{tpu_custom_call.1} parent=1 // pred_region
      _
    $region5: #{tpu_custom_call.1} parent=1 // pred_fallthru
      _
    // Predicated region
    $region6: #{tpu_custom_call.1} parent=1 // pred_check
      _
    $region7: #{tpu_custom_call.1} parent=1 // pred_check_branch
      %19 = sbr.rel (0) target = $region9
    $region8: #{tpu_custom_call.1} parent=1 // pred_region
      %s21 = ssub.s32 128, 128
      %22 = vsyncadd [#allocation3], %s21
      %s24 = sshll.u32 [#allocation2], 4
      %s25 = int_to_ptr.vmem [resolvable:$true] %s24
      %27 = dma.hbm_to_vmem [thread:$0]  %s1, 128, %s25, [#allocation3]
    $region9: #{tpu_custom_call.1} parent=1 // pred_fallthru
      _
    // Predicated region
    $region10: #{tpu_custom_call.1} parent=1 // pred_check
      _
    $region11: #{tpu_custom_call.1} parent=1 // pred_check_branch
      %29 = sbr.rel (0) target = $region13
    $region12: #{tpu_custom_call.1} parent=1 // pred_region
      _
    $region13: #{tpu_custom_call.1} parent=1 // pred_fallthru
      _
    // Predicated region
    $region14: #{tpu_custom_call.1} parent=1 // pred_check
      _
    $region15: #{tpu_custom_call.1} parent=1 // pred_check_branch
      %31 = sbr.rel (0) target = $region17
    $region16: #{tpu_custom_call.1} parent=1 // pred_region
      %s33 = ssub.s32 64, 64
      %34 = vsyncadd [#allocation6], %s33
      %s36 = sshll.u32 [#allocation5], 4
      %s37 = int_to_ptr.vmem [resolvable:$true] %s36
      %39 = dma.hbm_to_vmem [thread:$0]  %s3, 64, %s37, [#allocation6]
    $region17: #{tpu_custom_call.1} parent=1 // pred_fallthru
      _
    // Predicated region
    $region18: #{tpu_custom_call.1} parent=1 // pred_check
      _
    $region19: #{tpu_custom_call.1} parent=1 // pred_check_branch
      %41 = sbr.rel (0) target = $region21
    $region20: #{tpu_custom_call.1} parent=1 // pred_region
      %s43 = ssub.s32 64, 64
      %44 = vsyncadd [#allocation6], %s43
      %s46 = sshll.u32 [#allocation7], 4
      %s47 = int_to_ptr.vmem [resolvable:$true] %s46
      %49 = dma.hbm_to_vmem [thread:$0]  %s4, 64, %s47, [#allocation6]
    $region21: #{tpu_custom_call.1} parent=1 // pred_fallthru
      _
    // Predicated region
    $region22: #{tpu_custom_call.1} parent=1 // pred_check
      _
    $region23: #{tpu_custom_call.1} parent=1 // pred_check_branch
      %51 = sbr.rel (0) target = $region25
    $region24: #{tpu_custom_call.1} parent=1 // pred_region
      _
    $region25: #{tpu_custom_call.1} parent=1 // pred_fallthru
      _
    // Predicated region
    $region26: #{tpu_custom_call.1} parent=1 // pred_check
      _
    $region27: #{tpu_custom_call.1} parent=1 // pred_check_branch
      %53 = sbr.rel (0) target = $region29
    $region28: #{tpu_custom_call.1} parent=1 // pred_region
      _
    $region29: #{tpu_custom_call.1} parent=1 // pred_fallthru
      _
    // Predicated region
    $region30: #{tpu_custom_call.1} parent=1 // pred_check
      _
    $region31: #{tpu_custom_call.1} parent=1 // pred_check_branch
      %55 = sbr.rel (0) target = $region33
    $region32: #{tpu_custom_call.1} parent=1 // pred_region
      _
    $region33: #{tpu_custom_call.1} parent=1 // pred_fallthru
      _
    // Predicated region
    $region34: #{tpu_custom_call.1} parent=1 // pred_check
      _
    $region35: #{tpu_custom_call.1} parent=1 // pred_check_branch
      %57 = sbr.rel (0) target = $region37
    $region36: #{tpu_custom_call.1} parent=1 // pred_region
      %58 = dma.done [#allocation3], 128
    $region37: #{tpu_custom_call.1} parent=1 // pred_fallthru
      _
    // Predicated region
    $region38: #{tpu_custom_call.1} parent=1 // pred_check
      _
    $region39: #{tpu_custom_call.1} parent=1 // pred_check_branch
      %60 = sbr.rel (0) target = $region41
    $region40: #{tpu_custom_call.1} parent=1 // pred_region
      %61 = dma.done [#allocation6], 64
    $region41: #{tpu_custom_call.1} parent=1 // pred_fallthru
      _
    // Predicated region
    $region42: #{tpu_custom_call.1} parent=1 // pred_check
      _
    $region43: #{tpu_custom_call.1} parent=1 // pred_check_branch
      %63 = sbr.rel (0) target = $region45
    $region44: #{tpu_custom_call.1} parent=1 // pred_region
      %64 = dma.done [#allocation6], 64
    $region45: #{tpu_custom_call.1} parent=1 // pred_fallthru
      _
    %v66 = vld [vmem:[%s6] sm:$0xff]
    %v67 = vld [vmem:[%s7] sm:$0xff]
    %v68 = vunpack.c.l.bf16 %v66
    %v69 = vunpack.c.h.bf16 %v66
    %v70 = vadd.f32 %v68, %v69
    %71 = vadd.xlane.f32.xlu0 %v70
    %v72 = vpop.xlane.xlu0 %71
    %v73 = vmul.f32 %v72, 0.00390625
    %v74 = vunpack.c.l.bf16 %v67
    %v75 = vunpack.c.h.bf16 %v67
    %v76 = vadd.f32 %v74, %v75
    %77 = vadd.xlane.f32.xlu0 %v76
    %v78 = vpop.xlane.xlu0 %77
    %v79 = vmul.f32 %v78, 0.00390625
    %v80 = vld [vmem:[%s0] sm:$0xff]
    %v81 = vld [vmem:[#allocation2] sm:$0xff]
    %vm82 = vcmask 64512
    %v84 = vsel %vm82, %v81, 0
    %86 = vmatprep.subr.mxu0 0.0
    %87 = vmatpush1.msra.mxu0 %v79
    %88 = vmatprep.subr.mxu0 0.0
    %89 = vmatpush1.msra.mxu0 0.0
    %90 = vmatprep.subr.mxu0 0.0
    %91 = vmatpush1.msra.mxu0 0.0
    %92 = vmatprep.subr.mxu0 0.0
    %93 = vmatpush1.msra.mxu0 0.0
    %94 = vmatprep.subr.mxu0 0.0
    %95 = vmatpush1.msra.mxu0 0.0
    %96 = vmatprep.subr.mxu0 0.0
    %97 = vmatpush1.msra.mxu0 0.0
    %98 = vmatprep.subr.mxu0 0.0
    %99 = vmatpush1.msra.mxu0 0.0
    %100 = vmatprep.subr.mxu0 0.0
    %101 = vmatpush1.msra.mxu0 0.0
    %102 = vmatprep.subr.mxu0 0.0
    %103 = vmatpush1.msra.mxu0 0.0
    %104 = vmatprep.subr.mxu0 0.0
    %105 = vmatpush1.msra.mxu0 0.0
    %106 = vmatprep.subr.mxu0 0.0
    %107 = vmatpush1.msra.mxu0 0.0
    %108 = vmatprep.subr.mxu0 0.0
    %109 = vmatpush1.msra.mxu0 0.0
    %110 = vmatprep.subr.mxu0 0.0
    %111 = vmatpush1.msra.mxu0 0.0
    %112 = vmatprep.subr.mxu0 0.0
    %113 = vmatpush1.msra.mxu0 0.0
    %114 = vmatprep.subr.mxu0 0.0
    %115 = vmatpush1.msra.mxu0 0.0
    %116 = vmatprep.subr.mxu0 0.0
    %117 = vmatpush1.msra.mxu0 0.0
    %118 = vmatprep.subr.mxu0 0.0
    %119 = vmatpush1.msra.mxu0 0.0
    %120 = vmatprep.subr.mxu0 0.0
    %121 = vmatpush1.msra.mxu0 0.0
    %122 = vmatprep.subr.mxu0 0.0
    %123 = vmatpush1.msra.mxu0 0.0
    %124 = vmatprep.subr.mxu0 0.0
    %125 = vmatpush1.msra.mxu0 0.0
    %126 = vmatprep.subr.mxu0 0.0
    %127 = vmatpush1.msra.mxu0 0.0
    %128 = vmatprep.subr.mxu0 0.0
    %129 = vmatpush1.msra.mxu0 0.0
    %130 = vmatprep.subr.mxu0 0.0
    %131 = vmatpush1.msra.mxu0 0.0
    %132 = vmatprep.subr.mxu0 0.0
    %133 = vmatpush1.msra.mxu0 0.0
    %134 = vmatprep.subr.mxu0 0.0
    %135 = vmatpush1.msra.mxu0 0.0
    %136 = vmatprep.subr.mxu0 0.0
    %137 = vmatpush1.msra.mxu0 0.0
    %138 = vmatprep.subr.mxu0 0.0
    %139 = vmatpush1.msra.mxu0 0.0
    %140 = vmatprep.subr.mxu0 0.0
    %141 = vmatpush1.msra.mxu0 0.0
    %142 = vmatprep.subr.mxu0 0.0
    %143 = vmatpush1.msra.mxu0 0.0
    %144 = vmatprep.subr.mxu0 0.0
    %145 = vmatpush1.msra.mxu0 0.0
    %146 = vmatprep.subr.mxu0 0.0
    %147 = vmatpush1.msra.mxu0 0.0
    %148 = vmatprep.subr.mxu0 0.0
    %149 = vmatpush1.msra.mxu0 0.0
    %150 = vmatprep.mubr.f32.mxu0 0.0
    %151 = vmatmul.mubr.f32.gmra.mrb[0].mxu0 %v84
    %v152 = vpop.f32.mrb[0].mxu0
    %v153 = vadd.f32 0.0, %v152
    %v154 = vpop.f32.mrb[0].mxu0
    %155 = vdwg.mxu0
    %v157 = vsel %vm82, %v80, 0
    %159 = vmatprep.subr.mxu0 0.0
    %160 = vmatpush1.msra.mxu0 %v73
    %161 = vmatprep.subr.mxu0 0.0
    %162 = vmatpush1.msra.mxu0 0.0
    %163 = vmatprep.subr.mxu0 0.0
    %164 = vmatpush1.msra.mxu0 0.0
    %165 = vmatprep.subr.mxu0 0.0
    %166 = vmatpush1.msra.mxu0 0.0
    %167 = vmatprep.subr.mxu0 0.0
    %168 = vmatpush1.msra.mxu0 0.0
    %169 = vmatprep.subr.mxu0 0.0
    %170 = vmatpush1.msra.mxu0 0.0
    %171 = vmatprep.subr.mxu0 0.0
    %172 = vmatpush1.msra.mxu0 0.0
    %173 = vmatprep.subr.mxu0 0.0
    %174 = vmatpush1.msra.mxu0 0.0
    %175 = vmatprep.subr.mxu0 0.0
    %176 = vmatpush1.msra.mxu0 0.0
    %177 = vmatprep.subr.mxu0 0.0
    %178 = vmatpush1.msra.mxu0 0.0
    %179 = vmatprep.subr.mxu0 0.0
    %180 = vmatpush1.msra.mxu0 0.0
    %181 = vmatprep.subr.mxu0 0.0
    %182 = vmatpush1.msra.mxu0 0.0
    %183 = vmatprep.subr.mxu0 0.0
    %184 = vmatpush1.msra.mxu0 0.0
    %185 = vmatprep.subr.mxu0 0.0
    %186 = vmatpush1.msra.mxu0 0.0
    %187 = vmatprep.subr.mxu0 0.0
    %188 = vmatpush1.msra.mxu0 0.0
    %189 = vmatprep.subr.mxu0 0.0
    %190 = vmatpush1.msra.mxu0 0.0
    %191 = vmatprep.subr.mxu0 0.0
    %192 = vmatpush1.msra.mxu0 0.0
    %193 = vmatprep.subr.mxu0 0.0
    %194 = vmatpush1.msra.mxu0 0.0
    %195 = vmatprep.subr.mxu0 0.0
    %196 = vmatpush1.msra.mxu0 0.0
    %197 = vmatprep.subr.mxu0 0.0
    %198 = vmatpush1.msra.mxu0 0.0
    %199 = vmatprep.subr.mxu0 0.0
    %200 = vmatpush1.msra.mxu0 0.0
    %201 = vmatprep.subr.mxu0 0.0
    %202 = vmatpush1.msra.mxu0 0.0
    %203 = vmatprep.subr.mxu0 0.0
    %204 = vmatpush1.msra.mxu0 0.0
    %205 = vmatprep.subr.mxu0 0.0
    %206 = vmatpush1.msra.mxu0 0.0
    %207 = vmatprep.subr.mxu0 0.0
    %208 = vmatpush1.msra.mxu0 0.0
    %209 = vmatprep.subr.mxu0 0.0
    %210 = vmatpush1.msra.mxu0 0.0
    %211 = vmatprep.subr.mxu0 0.0
    %212 = vmatpush1.msra.mxu0 0.0
    %213 = vmatprep.subr.mxu0 0.0
    %214 = vmatpush1.msra.mxu0 0.0
    %215 = vmatprep.subr.mxu0 0.0
    %216 = vmatpush1.msra.mxu0 0.0
    %217 = vmatprep.subr.mxu0 0.0
    %218 = vmatpush1.msra.mxu0 0.0
    %219 = vmatprep.subr.mxu0 0.0
    %220 = vmatpush1.msra.mxu0 0.0
    %221 = vmatprep.subr.mxu0 0.0
    %222 = vmatpush1.msra.mxu0 0.0
    %223 = vmatprep.mubr.f32.mxu0 0.0
    %224 = vmatmul.mubr.f32.gmra.mrb[0].mxu0 %v157
    %v225 = vpop.f32.mrb[0].mxu0
    %v226 = vadd.f32 %v153, %v225
    %v227 = vpop.f32.mrb[0].mxu0
    %228 = vdwg.mxu0
    %v229 = vld [vmem:[%s2] sm:$0xff]
    %230 = vmatprep.subr.mxu0 0.0
    %231 = vmatpush1.msra.mxu0 %v79
    %232 = vmatprep.subr.mxu0 0.0
    %233 = vmatpush1.msra.mxu0 0.0
    %234 = vmatprep.subr.mxu0 0.0
    %235 = vmatpush1.msra.mxu0 0.0
    %236 = vmatprep.subr.mxu0 0.0
    %237 = vmatpush1.msra.mxu0 0.0
    %238 = vmatprep.subr.mxu0 0.0
    %239 = vmatpush1.msra.mxu0 0.0
    %240 = vmatprep.subr.mxu0 0.0
    %241 = vmatpush1.msra.mxu0 0.0
    %242 = vmatprep.subr.mxu0 0.0
    %243 = vmatpush1.msra.mxu0 0.0
    %244 = vmatprep.subr.mxu0 0.0
    %245 = vmatpush1.msra.mxu0 0.0
    %246 = vmatprep.subr.mxu0 0.0
    %247 = vmatpush1.msra.mxu0 0.0
    %248 = vmatprep.subr.mxu0 0.0
    %249 = vmatpush1.msra.mxu0 0.0
    %250 = vmatprep.subr.mxu0 0.0
    %251 = vmatpush1.msra.mxu0 0.0
    %252 = vmatprep.subr.mxu0 0.0
    %253 = vmatpush1.msra.mxu0 0.0
    %254 = vmatprep.subr.mxu0 0.0
    %255 = vmatpush1.msra.mxu0 0.0
    %256 = vmatprep.subr.mxu0 0.0
    %257 = vmatpush1.msra.mxu0 0.0
    %258 = vmatprep.subr.mxu0 0.0
    %259 = vmatpush1.msra.mxu0 0.0
    %260 = vmatprep.subr.mxu0 0.0
    %261 = vmatpush1.msra.mxu0 0.0
    %262 = vmatprep.subr.mxu0 0.0
    %263 = vmatpush1.msra.mxu0 0.0
    %264 = vmatprep.subr.mxu0 0.0
    %265 = vmatpush1.msra.mxu0 0.0
    %266 = vmatprep.subr.mxu0 0.0
    %267 = vmatpush1.msra.mxu0 0.0
    %268 = vmatprep.subr.mxu0 0.0
    %269 = vmatpush1.msra.mxu0 0.0
    %270 = vmatprep.subr.mxu0 0.0
    %271 = vmatpush1.msra.mxu0 0.0
    %272 = vmatprep.subr.mxu0 0.0
    %273 = vmatpush1.msra.mxu0 0.0
    %274 = vmatprep.subr.mxu0 0.0
    %275 = vmatpush1.msra.mxu0 0.0
    %276 = vmatprep.subr.mxu0 0.0
    %277 = vmatpush1.msra.mxu0 0.0
    %278 = vmatprep.subr.mxu0 0.0
    %279 = vmatpush1.msra.mxu0 0.0
    %280 = vmatprep.subr.mxu0 0.0
    %281 = vmatpush1.msra.mxu0 0.0
    %282 = vmatprep.subr.mxu0 0.0
    %283 = vmatpush1.msra.mxu0 0.0
    %284 = vmatprep.subr.mxu0 0.0
    %285 = vmatpush1.msra.mxu0 0.0
    %286 = vmatprep.subr.mxu0 0.0
    %287 = vmatpush1.msra.mxu0 0.0
    %288 = vmatprep.subr.mxu0 0.0
    %289 = vmatpush1.msra.mxu0 0.0
    %290 = vmatprep.subr.mxu0 0.0
    %291 = vmatpush1.msra.mxu0 0.0
    %292 = vmatprep.subr.mxu0 0.0
    %293 = vmatpush1.msra.mxu0 0.0
    %294 = vmatprep.mubr.f32.mxu0 0.0
    %295 = vmatmul.mubr.f32.gmra.mrb[0].mxu0 %v157
    %v296 = vpop.f32.mrb[0].mxu0
    %v297 = vadd.f32 0.0, %v296
    %v298 = vpop.f32.mrb[0].mxu0
    %299 = vdwg.mxu0
    %v301 = vsel %vm82, %v229, 0
    %303 = vmatprep.subr.mxu0 0.0
    %304 = vmatpush1.msra.mxu0 %v73
    %305 = vmatprep.subr.mxu0 0.0
    %306 = vmatpush1.msra.mxu0 0.0
    %307 = vmatprep.subr.mxu0 0.0
    %308 = vmatpush1.msra.mxu0 0.0
    %309 = vmatprep.subr.mxu0 0.0
    %310 = vmatpush1.msra.mxu0 0.0
    %311 = vmatprep.subr.mxu0 0.0
    %312 = vmatpush1.msra.mxu0 0.0
    %313 = vmatprep.subr.mxu0 0.0
    %314 = vmatpush1.msra.mxu0 0.0
    %315 = vmatprep.subr.mxu0 0.0
    %316 = vmatpush1.msra.mxu0 0.0
    %317 = vmatprep.subr.mxu0 0.0
    %318 = vmatpush1.msra.mxu0 0.0
    %319 = vmatprep.subr.mxu0 0.0
    %320 = vmatpush1.msra.mxu0 0.0
    %321 = vmatprep.subr.mxu0 0.0
    %322 = vmatpush1.msra.mxu0 0.0
    %323 = vmatprep.subr.mxu0 0.0
    %324 = vmatpush1.msra.mxu0 0.0
    %325 = vmatprep.subr.mxu0 0.0
    %326 = vmatpush1.msra.mxu0 0.0
    %327 = vmatprep.subr.mxu0 0.0
    %328 = vmatpush1.msra.mxu0 0.0
    %329 = vmatprep.subr.mxu0 0.0
    %330 = vmatpush1.msra.mxu0 0.0
    %331 = vmatprep.subr.mxu0 0.0
    %332 = vmatpush1.msra.mxu0 0.0
    %333 = vmatprep.subr.mxu0 0.0
    %334 = vmatpush1.msra.mxu0 0.0
    %335 = vmatprep.subr.mxu0 0.0
    %336 = vmatpush1.msra.mxu0 0.0
    %337 = vmatprep.subr.mxu0 0.0
    %338 = vmatpush1.msra.mxu0 0.0
    %339 = vmatprep.subr.mxu0 0.0
    %340 = vmatpush1.msra.mxu0 0.0
    %341 = vmatprep.subr.mxu0 0.0
    %342 = vmatpush1.msra.mxu0 0.0
    %343 = vmatprep.subr.mxu0 0.0
    %344 = vmatpush1.msra.mxu0 0.0
    %345 = vmatprep.subr.mxu0 0.0
    %346 = vmatpush1.msra.mxu0 0.0
    %347 = vmatprep.subr.mxu0 0.0
    %348 = vmatpush1.msra.mxu0 0.0
    %349 = vmatprep.subr.mxu0 0.0
    %350 = vmatpush1.msra.mxu0 0.0
    %351 = vmatprep.subr.mxu0 0.0
    %352 = vmatpush1.msra.mxu0 0.0
    %353 = vmatprep.subr.mxu0 0.0
    %354 = vmatpush1.msra.mxu0 0.0
    %355 = vmatprep.subr.mxu0 0.0
    %356 = vmatpush1.msra.mxu0 0.0
    %357 = vmatprep.subr.mxu0 0.0
    %358 = vmatpush1.msra.mxu0 0.0
    %359 = vmatprep.subr.mxu0 0.0
    %360 = vmatpush1.msra.mxu0 0.0
    %361 = vmatprep.subr.mxu0 0.0
    %362 = vmatpush1.msra.mxu0 0.0
    %363 = vmatprep.subr.mxu0 0.0
    %364 = vmatpush1.msra.mxu0 0.0
    %365 = vmatprep.subr.mxu0 0.0
    %366 = vmatpush1.msra.mxu0 0.0
    %367 = vmatprep.mubr.f32.mxu0 0.0
    %368 = vmatmul.mubr.f32.gmra.mrb[0].mxu0 %v301
    %v369 = vpop.f32.mrb[0].mxu0
    %v370 = vadd.f32 %v297, %v369
    %v371 = vpop.f32.mrb[0].mxu0
    %372 = vdwg.mxu0
    %v373 = vxor.u32 %v226, 2147483648
    %v374 = vmul.f32 %v373, 1.442695
    %v375 = vpow.pop %v374
    %v376 = vadd.f32 %v375, 1.0
    %v377 = vrcp.pop %v376
    %v378 = vmul.f32 1.0, %v377
    %v379 = vpack.c.bf16 %v378, %v378
    %v380 = vxor.u32 %v370, 2147483648
    %v381 = vmul.f32 %v380, 1.442695
    %v382 = vpow.pop %v381
    %v383 = vadd.f32 %v382, 1.0
    %v384 = vrcp.pop %v383
    %v385 = vmul.f32 1.0, %v384
    %v386 = vpack.c.bf16 %v385, %v385
    %388 = vset.pattern.permute.xlu0 0
    %389 = vperm.xlu0 %388, %v379
    %v390 = vpop.permute.xlu0 %389
    %v393 = vunpack.c.l.s4 839922192
    %v394 = vunpack.c.0.s8 %v393
    %v395 = vlaneseq
    %v396 = vshrl.u32 %v395, 7
    %v397 = vsub.s32 %v394, %v396
    %v398 = vrot.slane %v390, %v397
    %v400 = vmul.bf16 %v66, %v398
    %402 = vset.pattern.permute.xlu0 0
    %403 = vperm.xlu0 %402, %v386
    %v404 = vpop.permute.xlu0 %403
    %v407 = vunpack.c.l.s4 839922192
    %v408 = vunpack.c.0.s8 %v407
    %v409 = vlaneseq
    %v410 = vshrl.u32 %v409, 7
    %v411 = vsub.s32 %v408, %v410
    %v412 = vrot.slane %v404, %v411
    %v414 = vmul.bf16 %v67, %v412
    %v415 = vld [vmem:[#allocation5] sm:$0xf]
    %v416 = vld [vmem:[#allocation7] sm:$0xf]
    %v418 = vunpack.c.l.b16 %v414
    %v419 = vunpack.c.h.b16 %v414
    %v420 = vpack.c.b16 %v418, %v418
    %v421 = vpack.c.b16 %v419, %v419
    %v423 = vsel %vm82, %v416, 0
    %vm425 = vcmask 1043456
    %v427 = vsel %vm425, %v420, 0
    %v430 = vsel %vm425, %v421, 0
    %432 = vmatprep.subr.bf16.mxu0 %v430
    %433 = vmatpush1.bf16.msra.mxu0 %v427
    %434 = vmatprep.subr.bf16.mxu0 0
    %435 = vmatpush1.bf16.msra.mxu0 0
    %436 = vmatprep.subr.bf16.mxu0 0
    %437 = vmatpush1.bf16.msra.mxu0 0
    %438 = vmatprep.subr.bf16.mxu0 0
    %439 = vmatpush1.bf16.msra.mxu0 0
    %440 = vmatprep.subr.bf16.mxu0 0
    %441 = vmatpush1.bf16.msra.mxu0 0
    %442 = vmatprep.subr.bf16.mxu0 0
    %443 = vmatpush1.bf16.msra.mxu0 0
    %444 = vmatprep.subr.bf16.mxu0 0
    %445 = vmatpush1.bf16.msra.mxu0 0
    %446 = vmatprep.subr.bf16.mxu0 0
    %447 = vmatpush1.bf16.msra.mxu0 0
    %448 = vmatprep.subr.bf16.mxu0 0
    %449 = vmatpush1.bf16.msra.mxu0 0
    %450 = vmatprep.subr.bf16.mxu0 0
    %451 = vmatpush1.bf16.msra.mxu0 0
    %452 = vmatprep.subr.bf16.mxu0 0
    %453 = vmatpush1.bf16.msra.mxu0 0
    %454 = vmatprep.subr.bf16.mxu0 0
    %455 = vmatpush1.bf16.msra.mxu0 0
    %456 = vmatprep.subr.bf16.mxu0 0
    %457 = vmatpush1.bf16.msra.mxu0 0
    %458 = vmatprep.subr.bf16.mxu0 0
    %459 = vmatpush1.bf16.msra.mxu0 0
    %460 = vmatprep.subr.bf16.mxu0 0
    %461 = vmatpush1.bf16.msra.mxu0 0
    %462 = vmatprep.subr.bf16.mxu0 0
    %463 = vmatpush1.bf16.msra.mxu0 0
    %464 = vmatprep.mubr.bf16.mxu0 0
    %465 = vmatmul.mubr.bf16.gmra.mrb[0].mxu0 %v423
    %v466 = vpop.f32.mrb[0].mxu0
    %v467 = vadd.f32 0.0, %v466
    %v468 = vpop.f32.mrb[0].mxu0
    %v469 = vadd.f32 0.0, %v468
    %v470 = vpop.f32.mrb[0].mxu0
    %v471 = vpop.f32.mrb[0].mxu0
    %472 = vdwg.mxu0
    %v474 = vunpack.c.l.b16 %v400
    %v475 = vunpack.c.h.b16 %v400
    %v476 = vpack.c.b16 %v474, %v474
    %v477 = vpack.c.b16 %v475, %v475
    %v479 = vsel %vm82, %v415, 0
    %v482 = vsel %vm425, %v476, 0
    %v485 = vsel %vm425, %v477, 0
    %487 = vmatprep.subr.bf16.mxu0 %v485
    %488 = vmatpush1.bf16.msra.mxu0 %v482
    %489 = vmatprep.subr.bf16.mxu0 0
    %490 = vmatpush1.bf16.msra.mxu0 0
    %491 = vmatprep.subr.bf16.mxu0 0
    %492 = vmatpush1.bf16.msra.mxu0 0
    %493 = vmatprep.subr.bf16.mxu0 0
    %494 = vmatpush1.bf16.msra.mxu0 0
    %495 = vmatprep.subr.bf16.mxu0 0
    %496 = vmatpush1.bf16.msra.mxu0 0
    %497 = vmatprep.subr.bf16.mxu0 0
    %498 = vmatpush1.bf16.msra.mxu0 0
    %499 = vmatprep.subr.bf16.mxu0 0
    %500 = vmatpush1.bf16.msra.mxu0 0
    %501 = vmatprep.subr.bf16.mxu0 0
    %502 = vmatpush1.bf16.msra.mxu0 0
    %503 = vmatprep.subr.bf16.mxu0 0
    %504 = vmatpush1.bf16.msra.mxu0 0
    %505 = vmatprep.subr.bf16.mxu0 0
    %506 = vmatpush1.bf16.msra.mxu0 0
    %507 = vmatprep.subr.bf16.mxu0 0
    %508 = vmatpush1.bf16.msra.mxu0 0
    %509 = vmatprep.subr.bf16.mxu0 0
    %510 = vmatpush1.bf16.msra.mxu0 0
    %511 = vmatprep.subr.bf16.mxu0 0
    %512 = vmatpush1.bf16.msra.mxu0 0
    %513 = vmatprep.subr.bf16.mxu0 0
    %514 = vmatpush1.bf16.msra.mxu0 0
    %515 = vmatprep.subr.bf16.mxu0 0
    %516 = vmatpush1.bf16.msra.mxu0 0
    %517 = vmatprep.subr.bf16.mxu0 0
    %518 = vmatpush1.bf16.msra.mxu0 0
    %519 = vmatprep.mubr.bf16.mxu0 0
    %520 = vmatmul.mubr.bf16.gmra.mrb[0].mxu0 %v479
    %v521 = vpop.f32.mrb[0].mxu0
    %v522 = vadd.f32 %v467, %v521
    %v523 = vpop.f32.mrb[0].mxu0
    %v524 = vadd.f32 %v469, %v523
    %v525 = vpop.f32.mrb[0].mxu0
    %v526 = vpop.f32.mrb[0].mxu0
    %527 = vdwg.mxu0
    %v528 = vld [vmem:[%s5] sm:$0xff]
    %530 = vset.pattern.permute.xlu0 0
    %531 = vperm.xlu0 %530, %v528
    %v532 = vpop.permute.xlu0 %531
    %v534 = vadd.f32 %v522, %v532
    %v535 = vadd.f32 %v524, %v532
    %v536 = vpack.c.bf16 %v534, %v534
    %v537 = vpack.c.bf16 %v535, %v535
    %v540 = vunpack.c.l.b16 %v536
    %v541 = vunpack.c.l.b16 %v537
    %v542 = vpack.c.b16 %v541, %v540
    %544 = vst [vmem:[#allocation8] sm:$0xff] %v542
    // Predicated region
    $region46: #{tpu_custom_call.1} parent=1 // pred_check
      _
    $region47: #{tpu_custom_call.1} parent=1 // pred_check_branch
      %546 = sbr.rel (0) target = $region49
    $region48: #{tpu_custom_call.1} parent=1 // pred_region
      %s548 = ssub.s32 128, 128
      %549 = vsyncadd [#allocation4], %s548
      %s551 = sshll.u32 [#allocation8], 4
      %s552 = int_to_ptr.vmem [resolvable:$true] %s551
      %554 = dma.vmem_to_hbm [thread:$0]  %s552, 128, %s8, [#allocation4]
    $region49: #{tpu_custom_call.1} parent=1 // pred_fallthru
      _
    // Predicated region
    $region50: #{tpu_custom_call.1} parent=1 // pred_check
      _
    $region51: #{tpu_custom_call.1} parent=1 // pred_check_branch
      %556 = sbr.rel (0) target = $region53
    $region52: #{tpu_custom_call.1} parent=1 // pred_region
      %557 = dma.done [#allocation4], 128
    $region53: #{tpu_custom_call.1} parent=1 // pred_fallthru
      _
    %558 = vsyncpa [#allocation3], 1
    %559 = vsyncpa [#allocation6], 1
    %560 = vsyncpa [#allocation4], 1

</llo_original>
